<compile_context>
chip_gen: v5e
topology: v5e:2x2
jax: 0.10.0
libtpu: 0.0.40
codegen_flags: <defaults>
</compile_context>

<pallas_src>
import functools

import jax
import jax.numpy as jnp
from jax.experimental import pallas as pl
from jax.experimental.pallas import tpu as pltpu


def _round_up(x, m):
    return (x + m - 1) // m * m


def _pick_tile(total, preferred):
    """Largest multiple of 128 that is <= preferred and divides `total`."""
    t = min(total, preferred)
    while total % t:
        t -= 128
    return max(t, 128)


# ---------------------------------------------------------------------------
# Stage 1: mask-weighted token histogram
#   counts[b, v] = sum_s attention_mask[b, s] * (input_ids[b, s] == v)
# ---------------------------------------------------------------------------
def token_count_kernel(ids_ref,      # VMEM (TB, TS) int32
                       mask_ref,     # VMEM (TB, TS) f32
                       counts_ref,   # VMEM (TB, Vp) f32   (resident across seq axis)
                       acc_ref,      # VMEM (TB, Vp) f32 scratch accumulator
                       *, vp):
    si = pl.program_id(1)

    @pl.when(si == 0)
    def _init():
        acc_ref[...] = jnp.zeros_like(acc_ref)

    ids = ids_ref[...]                                     # (TB, TS) int32
    mask = mask_ref[...]                                   # (TB, TS) f32
    tb, ts = ids.shape

    # Fold the attention mask into the ids: masked positions can never match
    # any vocab lane, so no mask broadcast against the vocab/hidden dims.
    masked_ids = jnp.where(mask > 0.0, ids, -1)            # (TB, TS) int32
    vocab_iota = jax.lax.broadcasted_iota(jnp.int32, (tb, ts, vp), 2)
    onehot = (masked_ids[:, :, None] == vocab_iota).astype(jnp.float32)
    acc_ref[...] += jnp.sum(onehot, axis=1)                # (TB, Vp)

    counts_ref[...] = acc_ref[...]


# ---------------------------------------------------------------------------
# Stage 2: batched embedding contraction + pooler + classifier MLP
#   sum_emb = counts @ E ; mean = sum_emb / count ; pooled = tanh(mean @ Wp + bp)
#   logits = ReLU/linear MLP(pooled)
# ---------------------------------------------------------------------------
def head_kernel(counts_ref,          # VMEM (TBB, Vp) f32
                emb_ref,             # VMEM (Vp, Hp)  bf16
                wp_ref, bp_ref,      # (Hp, Hp) bf16, (1, Hp) f32   pooler dense
                w1_ref, b1_ref,      # (Hp, H2p) bf16, (1, H2p) f32 classifier L1
                w2_ref, b2_ref,      # (H2p, H4p) bf16, (1, H4p) f32 classifier L2
                w3_ref, b3_ref,      # (H4p, Lp) bf16, (1, Lp) f32  classifier L3
                out_ref):            # VMEM (TBB, Lp) f32  lane-dense logits
    counts = counts_ref[...]                               # (TBB, Vp) f32
    cnt = jnp.sum(counts, axis=1, keepdims=True)           # (TBB, 1)  valid tokens

    # Embedding "gather" expressed as a batched MXU contraction.
    sum_emb = jnp.dot(counts.astype(jnp.bfloat16), emb_ref[...],
                      preferred_element_type=jnp.float32)  # (TBB, Hp)
    mean = sum_emb / jnp.maximum(cnt, 1.0)                 # exact divide (f32)

    pooled = jnp.tanh(
        jnp.dot(mean.astype(jnp.bfloat16), wp_ref[...],
                preferred_element_type=jnp.float32) + bp_ref[...])
    # self.dropout(pooled_output) -> identity at inference time.
    h1 = jnp.maximum(
        jnp.dot(pooled.astype(jnp.bfloat16), w1_ref[...],
                preferred_element_type=jnp.float32) + b1_ref[...], 0.0)
    h2 = jnp.maximum(
        jnp.dot(h1.astype(jnp.bfloat16), w2_ref[...],
                preferred_element_type=jnp.float32) + b2_ref[...], 0.0)
    logits = (jnp.dot(h2.astype(jnp.bfloat16), w3_ref[...],
                      preferred_element_type=jnp.float32) + b3_ref[...])
    out_ref[...] = logits.astype(out_ref.dtype)


def init_params(hidden_size, num_labels, vocab_size, seed=42):
    """Deterministic synthetic params, zero-padded to lane-friendly shapes."""
    keys = jax.random.split(jax.random.PRNGKey(seed), 9)
    h, h2, h4 = hidden_size, hidden_size // 2, hidden_size // 4
    hp, h2p = _round_up(h, 128), _round_up(h2, 128)
    h4p, lp = _round_up(h4, 128), _round_up(num_labels, 128)
    vp = _round_up(vocab_size, 128)

    def dense(key, n_in, n_out, n_in_p, n_out_p):
        scale = 1.0 / jnp.sqrt(jnp.float32(n_in))
        w = jax.random.uniform(key, (n_in, n_out), jnp.float32, -scale, scale)
        w_p = jnp.zeros((n_in_p, n_out_p), jnp.float32).at[:n_in, :n_out].set(w)
        return w_p.astype(jnp.bfloat16)        # MXU operands stored in bf16

    def bias(key, n_out, n_out_p):
        b = jax.random.normal(key, (n_out,), jnp.float32) * 0.01
        return jnp.zeros((1, n_out_p), jnp.float32).at[0, :n_out].set(b)

    emb = jax.random.normal(keys[0], (vocab_size, h), jnp.float32) * 0.02
    token_emb = jnp.zeros((vp, hp), jnp.float32).at[:vocab_size, :h].set(emb)

    return {
        "token_emb": token_emb.astype(jnp.bfloat16),   # bf16 table (perf feedback)
        "wp": dense(keys[1], h, h, hp, hp),
        "bp": bias(keys[2], h, hp),
        "w1": dense(keys[3], h, h2, hp, h2p),
        "b1": bias(keys[4], h2, h2p),
        "w2": dense(keys[5], h2, h4, h2p, h4p),
        "b2": bias(keys[6], h4, h4p),
        "w3": dense(keys[7], h4, num_labels, h4p, lp),
        "b3": bias(keys[8], num_labels, lp),
        "num_labels": num_labels,
    }


def advanced_fake_news_forward(params, input_ids, attention_mask, labels=None):
    """JAX wrapper mirroring AdvancedFakeNewsModel.forward."""
    B, S = input_ids.shape
    num_labels = params["num_labels"]
    token_emb = params["token_emb"]
    vp, hp = token_emb.shape
    h2p = params["w1"].shape[1]
    h4p = params["w2"].shape[1]
    lp = params["w3"].shape[1]

    TB = 8                                     # sublane-multiple batch tile
    B_pad = _round_up(B, TB)
    S_pad = _round_up(S, 128)                  # lane-dense sequence padding
    TS = _pick_tile(S_pad, 512)                # larger seq tiles amortize step overhead

    ids_p = jnp.zeros((B_pad, S_pad), jnp.int32).at[:B, :S].set(
        input_ids.astype(jnp.int32))
    mask_p = jnp.zeros((B_pad, S_pad), jnp.float32).at[:B, :S].set(
        attention_mask.astype(jnp.float32))

    # ---- stage 1: mask-weighted token histogram -----------------------------
    grid_a = (B_pad // TB, S_pad // TS)
    counts = pl.pallas_call(
        functools.partial(token_count_kernel, vp=vp),
        out_shape=jax.ShapeDtypeStruct((B_pad, vp), jnp.float32),
        grid_spec=pltpu.PrefetchScalarGridSpec(
            num_scalar_prefetch=0,
            grid=grid_a,
            in_specs=[
                pl.BlockSpec((TB, TS), lambda bi, si: (bi, si)),   # ids tile
                pl.BlockSpec((TB, TS), lambda bi, si: (bi, si)),   # mask tile
            ],
            out_specs=pl.BlockSpec((TB, vp), lambda bi, si: (bi, 0)),
            scratch_shapes=[pltpu.VMEM((TB, vp), jnp.float32)],
        ),
        compiler_params=pltpu.CompilerParams(
            dimension_semantics=("parallel", "arbitrary"),
            vmem_limit_bytes=32 * 1024 * 1024,
        ),
        cost_estimate=pl.CostEstimate(
            flops=2 * B_pad * S_pad * vp,
            transcendentals=0,
            bytes_accessed=B_pad * S_pad * 8 + B_pad * vp * 4,
        ),
    )(ids_p, mask_p)

    # ---- stage 2: batched pooler + classifier MLP (M = padded batch) --------
    if B_pad <= 256:
        TBB = B_pad
    elif B_pad % 256 == 0:
        TBB = 256
    else:
        TBB = 8
    grid_b = (B_pad // TBB,)

    mlp_flops = 2 * B_pad * (vp * hp + hp * hp + hp * h2p + h2p * h4p + h4p * lp)
    w_bytes = 2 * (vp * hp + hp * hp + hp * h2p + h2p * h4p + h4p * lp)

    logits_pad = pl.pallas_call(
        head_kernel,
        out_shape=jax.ShapeDtypeStruct((B_pad, lp), jnp.float32),
        grid_spec=pltpu.PrefetchScalarGridSpec(
            num_scalar_prefetch=0,
            grid=grid_b,
            in_specs=[
                pl.BlockSpec((TBB, vp), lambda i: (i, 0)),   # counts
                pl.BlockSpec((vp, hp), lambda i: (0, 0)),    # embedding table
                pl.BlockSpec((hp, hp), lambda i: (0, 0)),    # wp
                pl.BlockSpec((1, hp), lambda i: (0, 0)),     # bp
                pl.BlockSpec((hp, h2p), lambda i: (0, 0)),   # w1
                pl.BlockSpec((1, h2p), lambda i: (0, 0)),    # b1
                pl.BlockSpec((h2p, h4p), lambda i: (0, 0)),  # w2
                pl.BlockSpec((1, h4p), lambda i: (0, 0)),    # b2
                pl.BlockSpec((h4p, lp), lambda i: (0, 0)),   # w3
                pl.BlockSpec((1, lp), lambda i: (0, 0)),     # b3
            ],
            out_specs=pl.BlockSpec((TBB, lp), lambda i: (i, 0)),
        ),
        compiler_params=pltpu.CompilerParams(
            dimension_semantics=("parallel",),
            vmem_limit_bytes=32 * 1024 * 1024,
        ),
        cost_estimate=pl.CostEstimate(
            flops=mlp_flops,
            transcendentals=B_pad * hp,
            bytes_accessed=B_pad * vp * 4 + w_bytes + B_pad * lp * 4,
        ),
    )(counts, token_emb,
      params["wp"], params["bp"], params["w1"], params["b1"],
      params["w2"], params["b2"], params["w3"], params["b3"])

    # Drop batch / lane padding BEFORE the softmax so padded lanes never leak.
    logits = logits_pad[:B, :num_labels]

    if labels is not None:
        # CrossEntropyLoss (mean reduction) — tiny, kept as JAX glue.
        logz = jax.nn.log_softmax(logits, axis=-1)
        nll = -jnp.take_along_axis(logz, labels.reshape(-1, 1), axis=-1)[:, 0]
        loss = jnp.mean(nll)
        return {"loss": loss, "logits": logits}
    return {"logits": logits}


if __name__ == "__main__":
    B, S, H, NUM_LABELS, VOCAB = 2, 8, 32, 2, 100

    params = init_params(H, NUM_LABELS, VOCAB, seed=42)

    key = jax.random.PRNGKey(0)
    k_ids, k_len, k_lab = jax.random.split(key, 3)
    input_ids = jax.random.randint(k_ids, (B, S), 0, VOCAB, dtype=jnp.int32)
    # attention mask: first `len` tokens valid
    lens = jax.random.randint(k_len, (B,), 3, S + 1, dtype=jnp.int32)
    attention_mask = (jnp.arange(S)[None, :] < lens[:, None]).astype(jnp.int32)
    labels = jax.random.randint(k_lab, (B,), 0, NUM_LABELS, dtype=jnp.int32)

    out = advanced_fake_news_forward(params, input_ids, attention_mask, labels)
    jax.block_until_ready(out["logits"])
    jax.block_until_ready(out["loss"])

    assert out["logits"].shape == (B, NUM_LABELS)
    assert out["loss"].shape == ()
    print("KERNEL_OK")
</pallas_src>

<mosaic_0001>
module attributes {stable_mosaic.version = 11 : i64} {
  func.func @token_count_kernel(%arg0: i32, %arg1: i32, %arg2: memref<8x128xi32, #tpu.memory_space<vmem>>, %arg3: memref<8x128xf32, #tpu.memory_space<vmem>>, %arg4: memref<8x128xf32, #tpu.memory_space<vmem>>, %arg5: memref<8x128xf32, #tpu.memory_space<vmem>>) attributes {dimension_semantics = [#tpu.dimension_semantics<parallel>, #tpu.dimension_semantics<arbitrary>], iteration_bounds = array<i64: 1, 1>, scalar_prefetch = 0 : i64, scratch_operands = 1 : i64, tpu.core_type = #tpu.core_type<tc>, window_params = [{transform_indices = @transform_0, window_bounds = array<i64: 8, 128>}, {transform_indices = @transform_1, window_bounds = array<i64: 8, 128>}, {transform_indices = @transform_2, window_bounds = array<i64: 8, 128>}]} {
    %c0_i32 = arith.constant 0 : i32
    %0 = arith.cmpi eq, %arg1, %c0_i32 : i32
    %1 = arith.extui %0 : i1 to i32
    %c0_i32_0 = arith.constant 0 : i32
    %2 = arith.cmpi ne, %1, %c0_i32_0 : i32
    scf.if %2 {
      %cst_13 = arith.constant 0.000000e+00 : f32
      %21 = vector.broadcast %cst_13 : f32 to vector<8x128xf32>
      %c0_14 = arith.constant 0 : index
      %c0_15 = arith.constant 0 : index
      %22 = vector.load %arg5[%c0_14, %c0_15] : memref<8x128xf32, #tpu.memory_space<vmem>>, vector<8x128xf32>
      tpu.vector_store %arg5[%c0_14, %c0_15], %21 {strides = array<i32>} : memref<8x128xf32, #tpu.memory_space<vmem>>, vector<8x128xf32>,
    } else {
    }
    %c0 = arith.constant 0 : index
    %c0_1 = arith.constant 0 : index
    %3 = vector.load %arg2[%c0, %c0_1] : memref<8x128xi32, #tpu.memory_space<vmem>>, vector<8x128xi32>
    %c0_2 = arith.constant 0 : index
    %c0_3 = arith.constant 0 : index
    %4 = vector.load %arg3[%c0_2, %c0_3] : memref<8x128xf32, #tpu.memory_space<vmem>>, vector<8x128xf32>
    %cst = arith.constant 0.000000e+00 : f32
    %5 = vector.broadcast %cst : f32 to vector<8x128xf32>
    %6 = arith.cmpf ogt, %4, %5 : vector<8x128xf32>
    %c-1_i32 = arith.constant -1 : i32
    %7 = vector.broadcast %c-1_i32 : i32 to vector<8x128xi32>
    %8 = arith.select %6, %3, %7 : vector<8x128xi1>, vector<8x128xi32>
    %9 = tpu.iota {dimensions = array<i32: 2>} : vector<8x128x128xi32>
    %10 = vector.shape_cast %8 : vector<8x128xi32> to vector<8x128x1xi32>
    %11 = vector.broadcast %10 : vector<8x128x1xi32> to vector<8x128x128xi32>
    %12 = arith.cmpi eq, %11, %9 : vector<8x128x128xi32>
    %13 = arith.extui %12 : vector<8x128x128xi1> to vector<8x128x128xi32>
    %14 = arith.sitofp %13 : vector<8x128x128xi32> to vector<8x128x128xf32>
    %c0_4 = arith.constant 0 : index
    %c0_5 = arith.constant 0 : index
    %15 = vector.load %arg5[%c0_4, %c0_5] : memref<8x128xf32, #tpu.memory_space<vmem>>, vector<8x128xf32>
    %cst_6 = arith.constant dense<0.000000e+00> : vector<8x128xf32>
    %16 = vector.multi_reduction <add>, %14, %cst_6 [1] : vector<8x128x128xf32> to vector<8x128xf32>
    %17 = arith.addf %15, %16 : vector<8x128xf32>
    %c0_7 = arith.constant 0 : index
    %c0_8 = arith.constant 0 : index
    %18 = vector.load %arg5[%c0_7, %c0_8] : memref<8x128xf32, #tpu.memory_space<vmem>>, vector<8x128xf32>
    tpu.vector_store %arg5[%c0_7, %c0_8], %17 {strides = array<i32>} : memref<8x128xf32, #tpu.memory_space<vmem>>, vector<8x128xf32>,
    %c0_9 = arith.constant 0 : index
    %c0_10 = arith.constant 0 : index
    %19 = vector.load %arg5[%c0_9, %c0_10] : memref<8x128xf32, #tpu.memory_space<vmem>>, vector<8x128xf32>
    %c0_11 = arith.constant 0 : index
    %c0_12 = arith.constant 0 : index
    %20 = vector.load %arg4[%c0_11, %c0_12] : memref<8x128xf32, #tpu.memory_space<vmem>>, vector<8x128xf32>
    tpu.vector_store %arg4[%c0_11, %c0_12], %19 {strides = array<i32>} : memref<8x128xf32, #tpu.memory_space<vmem>>, vector<8x128xf32>,
    return
  }
  func.func @transform_0(%arg0: i32, %arg1: i32) -> (i32, i32) {
    %c0_i32 = arith.constant 0 : i32
    return %arg0, %arg1 : i32, i32
  }
  func.func @transform_1(%arg0: i32, %arg1: i32) -> (i32, i32) {
    %c0_i32 = arith.constant 0 : i32
    return %arg0, %arg1 : i32, i32
  }
  func.func @transform_2(%arg0: i32, %arg1: i32) -> (i32, i32) {
    %c0_i32 = arith.constant 0 : i32
    %c0_i32_0 = arith.constant 0 : i32
    return %arg0, %c0_i32 : i32, i32
  }
}

</mosaic_0001>

<llo_original>
// kernel: tpu_custom_call.1
$region0: #{tpu_custom_call.1}
  #allocation0 [shape = 'u32[]', space=smem, size = 0x4, offset = 0x4, fixed_abs, tag = 'smem constant byte address 0x4 - core index']
  #allocation1 [shape = 'u32[72,128]{1,0:T(1,128)}', space=vmem, size = 0x9000, scoped, tag = 'internal scratch']
  #allocation2 [shape = 'f32[8,128]{1,0:T(8,128)}', space=vmem, size = 0x1000, scoped, tag = 'scratch operand']
  %s0 = inlined_call_operand.hbm [shape: s32[8,128], index: 0, kind: input, shape index: {}]
  %s1 = inlined_call_operand.hbm [shape: f32[8,128], index: 1, kind: input, shape index: {}]
  %s2 = inlined_call_operand.hbm [shape: f32[8,128], index: 2, kind: output, shape index: {}]
  %s3 = sld [smem:[#allocation0]]
  $region30: #{tpu_custom_call.1} parent=0
    _
  %s5 = ssub.s32 1, %s3
  %s6 = scalar_select 0, %s5, %s3
  $region1: #{tpu_custom_call.1} parent=0
    #allocation3 [shape = 'u8[4096]{0}', space=vmem, size = 0x1000, scoped, tag = 'input window, operand 0, single buffered']
    #allocation4 [shape = 's32[1]{0}', space=sflag, size = 0x4, scoped, tag = 'scoped memory for tpu_custom_call.1']
    #allocation5 [shape = 's32[1]{0}', space=sflag, size = 0x4, scoped, tag = 'scoped memory for tpu_custom_call.1']
    #allocation6 [shape = 'u8[4096]{0}', space=vmem, size = 0x1000, scoped, tag = 'input window, operand 1, single buffered']
    #allocation7 [shape = 's32[1]{0}', space=sflag, size = 0x4, scoped, tag = 'scoped memory for tpu_custom_call.1']
    #allocation8 [shape = 'u8[4096]{0}', space=vmem, size = 0x1000, scoped, tag = 'output window, operand 0, single buffered']
    %7 = vsyncpa [#allocation4], 0
    %8 = vsyncpa [#allocation7], 0
    %9 = vsyncpa [#allocation5], 0
    // Predicated region
    $region2: #{tpu_custom_call.1} parent=1 // pred_check
      _
    $region3: #{tpu_custom_call.1} parent=1 // pred_check_branch
      %11 = sbr.rel (0) target = $region5
    $region4: #{tpu_custom_call.1} parent=1 // pred_region
      %13 = vsyncadd [#allocation4], 0
      %s15 = sshll.u32 %s0, 4
      %s16 = int_to_ptr.hbm [resolvable:$true] %s15
      %s17 = sshll.u32 [#allocation3], 4
      %s18 = int_to_ptr.vmem [resolvable:$true] %s17
      %20 = dma.hbm_to_vmem [thread:$0]  %s16, 128, %s18, [#allocation4]
    $region5: #{tpu_custom_call.1} parent=1 // pred_fallthru
      _
    // Predicated region
    $region6: #{tpu_custom_call.1} parent=1 // pred_check
      _
    $region7: #{tpu_custom_call.1} parent=1 // pred_check_branch
      %22 = sbr.rel (0) target = $region9
    $region8: #{tpu_custom_call.1} parent=1 // pred_region
      %24 = vsyncadd [#allocation7], 0
      %s26 = sshll.u32 %s1, 4
      %s27 = int_to_ptr.hbm [resolvable:$true] %s26
      %s28 = sshll.u32 [#allocation6], 4
      %s29 = int_to_ptr.vmem [resolvable:$true] %s28
      %31 = dma.hbm_to_vmem [thread:$0]  %s27, 128, %s29, [#allocation7]
    $region9: #{tpu_custom_call.1} parent=1 // pred_fallthru
      _
    // Predicated region
    $region10: #{tpu_custom_call.1} parent=1 // pred_check
      _
    $region11: #{tpu_custom_call.1} parent=1 // pred_check_branch
      %33 = sbr.rel (0) target = $region13
    $region12: #{tpu_custom_call.1} parent=1 // pred_region
      %35 = dma.done [#allocation4], 128
    $region13: #{tpu_custom_call.1} parent=1 // pred_fallthru
      _
    // Predicated region
    $region14: #{tpu_custom_call.1} parent=1 // pred_check
      _
    $region15: #{tpu_custom_call.1} parent=1 // pred_check_branch
      %37 = sbr.rel (0) target = $region17
    $region16: #{tpu_custom_call.1} parent=1 // pred_region
      %39 = dma.done [#allocation7], 128
    $region17: #{tpu_custom_call.1} parent=1 // pred_fallthru
      _
    %p40 = scmp.eq.s32.totalorder 0, 0
    // Predicated region
    $region18: #{tpu_custom_call.1} parent=1 // pred_check
      %p41 = pneg %p40
    $region19: #{tpu_custom_call.1} parent=1 // pred_check_branch
      %43 = sbr.rel (%p41) target = $region21
    $region20: #{tpu_custom_call.1} parent=1 // pred_region
      %44 = vst [vmem:[#allocation2] sm:$0xff] 0.0
    $region21: #{tpu_custom_call.1} parent=1 // pred_fallthru
      _
    %v45 = vld [vmem:[#allocation3] sm:$0xff]
    %v46 = vld [vmem:[#allocation6] sm:$0xff]
    %vm47 = vcmp.gt.f32.partialorder %v46, 0.0
    %v48 = vsel %vm47, %v45, 4294967295
    %v49 = vlaneseq
    %v50 = vand.u32 %v49, 127
    %v51 = vperm.slane %v48, 0
    %v52 = vlaneseq
    %v53 = vshrl.u32 %v52, 7
    %55 = vset.pattern.permute.xlu0 %v53
    %56 = vperm.xlu0 %55, %v51
    %v57 = vpop.permute.xlu0 %56
    %v58 = vlaneseq
    %v59 = vshrl.u32 %v58, 7
    %v60 = vadd.s32 %v59, 8
    %61 = vset.pattern.permute.xlu0 %v60
    %62 = vperm.xlu0 %61, %v51
    %v63 = vpop.permute.xlu0 %62
    %v64 = vlaneseq
    %v65 = vshrl.u32 %v64, 7
    %v66 = vadd.s32 %v65, 16
    %67 = vset.pattern.permute.xlu0 %v66
    %68 = vperm.xlu0 %67, %v51
    %v69 = vpop.permute.xlu0 %68
    %v70 = vlaneseq
    %v71 = vshrl.u32 %v70, 7
    %v72 = vadd.s32 %v71, 24
    %73 = vset.pattern.permute.xlu0 %v72
    %74 = vperm.xlu0 %73, %v51
    %v75 = vpop.permute.xlu0 %74
    %v76 = vlaneseq
    %v77 = vshrl.u32 %v76, 7
    %v78 = vadd.s32 %v77, 32
    %79 = vset.pattern.permute.xlu0 %v78
    %80 = vperm.xlu0 %79, %v51
    %v81 = vpop.permute.xlu0 %80
    %v82 = vlaneseq
    %v83 = vshrl.u32 %v82, 7
    %v84 = vadd.s32 %v83, 40
    %85 = vset.pattern.permute.xlu0 %v84
    %86 = vperm.xlu0 %85, %v51
    %v87 = vpop.permute.xlu0 %86
    %v88 = vlaneseq
    %v89 = vshrl.u32 %v88, 7
    %v90 = vadd.s32 %v89, 48
    %91 = vset.pattern.permute.xlu0 %v90
    %92 = vperm.xlu0 %91, %v51
    %v93 = vpop.permute.xlu0 %92
    %v94 = vlaneseq
    %v95 = vshrl.u32 %v94, 7
    %v96 = vadd.s32 %v95, 56
    %97 = vset.pattern.permute.xlu0 %v96
    %98 = vperm.xlu0 %97, %v51
    %v99 = vpop.permute.xlu0 %98
    %v100 = vlaneseq
    %v101 = vshrl.u32 %v100, 7
    %v102 = vadd.s32 %v101, 64
    %103 = vset.pattern.permute.xlu0 %v102
    %104 = vperm.xlu0 %103, %v51
    %v105 = vpop.permute.xlu0 %104
    %v106 = vlaneseq
    %v107 = vshrl.u32 %v106, 7
    %v108 = vadd.s32 %v107, 72
    %109 = vset.pattern.permute.xlu0 %v108
    %110 = vperm.xlu0 %109, %v51
    %v111 = vpop.permute.xlu0 %110
    %v112 = vlaneseq
    %v113 = vshrl.u32 %v112, 7
    %v114 = vadd.s32 %v113, 80
    %115 = vset.pattern.permute.xlu0 %v114
    %116 = vperm.xlu0 %115, %v51
    %v117 = vpop.permute.xlu0 %116
    %v118 = vlaneseq
    %v119 = vshrl.u32 %v118, 7
    %v120 = vadd.s32 %v119, 88
    %121 = vset.pattern.permute.xlu0 %v120
    %122 = vperm.xlu0 %121, %v51
    %v123 = vpop.permute.xlu0 %122
    %v124 = vlaneseq
    %v125 = vshrl.u32 %v124, 7
    %v126 = vadd.s32 %v125, 96
    %127 = vset.pattern.permute.xlu0 %v126
    %128 = vperm.xlu0 %127, %v51
    %v129 = vpop.permute.xlu0 %128
    %v130 = vlaneseq
    %v131 = vshrl.u32 %v130, 7
    %v132 = vadd.s32 %v131, 104
    %133 = vset.pattern.permute.xlu0 %v132
    %134 = vperm.xlu0 %133, %v51
    %v135 = vpop.permute.xlu0 %134
    %v136 = vlaneseq
    %v137 = vshrl.u32 %v136, 7
    %v138 = vadd.s32 %v137, 112
    %139 = vset.pattern.permute.xlu0 %v138
    %140 = vperm.xlu0 %139, %v51
    %v141 = vpop.permute.xlu0 %140
    %v142 = vlaneseq
    %v143 = vshrl.u32 %v142, 7
    %v144 = vadd.s32 %v143, 120
    %145 = vset.pattern.permute.xlu0 %v144
    %146 = vperm.xlu0 %145, %v51
    %v147 = vpop.permute.xlu0 %146
    %v148 = vperm.slane %v48, 1
    %v149 = vlaneseq
    %v150 = vshrl.u32 %v149, 7
    %152 = vset.pattern.permute.xlu0 %v150
    %153 = vperm.xlu0 %152, %v148
    %v154 = vpop.permute.xlu0 %153
    %v155 = vlaneseq
    %v156 = vshrl.u32 %v155, 7
    %v157 = vadd.s32 %v156, 8
    %158 = vset.pattern.permute.xlu0 %v157
    %159 = vperm.xlu0 %158, %v148
    %v160 = vpop.permute.xlu0 %159
    %v161 = vlaneseq
    %v162 = vshrl.u32 %v161, 7
    %v163 = vadd.s32 %v162, 16
    %164 = vset.pattern.permute.xlu0 %v163
    %165 = vperm.xlu0 %164, %v148
    %v166 = vpop.permute.xlu0 %165
    %v167 = vlaneseq
    %v168 = vshrl.u32 %v167, 7
    %v169 = vadd.s32 %v168, 24
    %170 = vset.pattern.permute.xlu0 %v169
    %171 = vperm.xlu0 %170, %v148
    %v172 = vpop.permute.xlu0 %171
    %v173 = vlaneseq
    %v174 = vshrl.u32 %v173, 7
    %v175 = vadd.s32 %v174, 32
    %176 = vset.pattern.permute.xlu0 %v175
    %177 = vperm.xlu0 %176, %v148
    %v178 = vpop.permute.xlu0 %177
    %v179 = vlaneseq
    %v180 = vshrl.u32 %v179, 7
    %v181 = vadd.s32 %v180, 40
    %182 = vset.pattern.permute.xlu0 %v181
    %183 = vperm.xlu0 %182, %v148
    %v184 = vpop.permute.xlu0 %183
    %v185 = vlaneseq
    %v186 = vshrl.u32 %v185, 7
    %v187 = vadd.s32 %v186, 48
    %188 = vset.pattern.permute.xlu0 %v187
    %189 = vperm.xlu0 %188, %v148
    %v190 = vpop.permute.xlu0 %189
    %v191 = vlaneseq
    %v192 = vshrl.u32 %v191, 7
    %v193 = vadd.s32 %v192, 56
    %194 = vset.pattern.permute.xlu0 %v193
    %195 = vperm.xlu0 %194, %v148
    %v196 = vpop.permute.xlu0 %195
    %v197 = vlaneseq
    %v198 = vshrl.u32 %v197, 7
    %v199 = vadd.s32 %v198, 64
    %200 = vset.pattern.permute.xlu0 %v199
    %201 = vperm.xlu0 %200, %v148
    %v202 = vpop.permute.xlu0 %201
    %v203 = vlaneseq
    %v204 = vshrl.u32 %v203, 7
    %v205 = vadd.s32 %v204, 72
    %206 = vset.pattern.permute.xlu0 %v205
    %207 = vperm.xlu0 %206, %v148
    %v208 = vpop.permute.xlu0 %207
    %v209 = vlaneseq
    %v210 = vshrl.u32 %v209, 7
    %v211 = vadd.s32 %v210, 80
    %212 = vset.pattern.permute.xlu0 %v211
    %213 = vperm.xlu0 %212, %v148
    %v214 = vpop.permute.xlu0 %213
    %v215 = vlaneseq
    %v216 = vshrl.u32 %v215, 7
    %v217 = vadd.s32 %v216, 88
    %218 = vset.pattern.permute.xlu0 %v217
    %219 = vperm.xlu0 %218, %v148
    %v220 = vpop.permute.xlu0 %219
    %v221 = vlaneseq
    %v222 = vshrl.u32 %v221, 7
    %v223 = vadd.s32 %v222, 96
    %224 = vset.pattern.permute.xlu0 %v223
    %225 = vperm.xlu0 %224, %v148
    %v226 = vpop.permute.xlu0 %225
    %v227 = vlaneseq
    %v228 = vshrl.u32 %v227, 7
    %v229 = vadd.s32 %v228, 104
    %230 = vset.pattern.permute.xlu0 %v229
    %231 = vperm.xlu0 %230, %v148
    %v232 = vpop.permute.xlu0 %231
    %v233 = vlaneseq
    %v234 = vshrl.u32 %v233, 7
    %v235 = vadd.s32 %v234, 112
    %236 = vset.pattern.permute.xlu0 %v235
    %237 = vperm.xlu0 %236, %v148
    %v238 = vpop.permute.xlu0 %237
    %v239 = vlaneseq
    %v240 = vshrl.u32 %v239, 7
    %v241 = vadd.s32 %v240, 120
    %242 = vset.pattern.permute.xlu0 %v241
    %243 = vperm.xlu0 %242, %v148
    %v244 = vpop.permute.xlu0 %243
    %v245 = vperm.slane %v48, 2
    %v246 = vlaneseq
    %v247 = vshrl.u32 %v246, 7
    %249 = vset.pattern.permute.xlu0 %v247
    %250 = vperm.xlu0 %249, %v245
    %v251 = vpop.permute.xlu0 %250
    %v252 = vlaneseq
    %v253 = vshrl.u32 %v252, 7
    %v254 = vadd.s32 %v253, 8
    %255 = vset.pattern.permute.xlu0 %v254
    %256 = vperm.xlu0 %255, %v245
    %v257 = vpop.permute.xlu0 %256
    %v258 = vlaneseq
    %v259 = vshrl.u32 %v258, 7
    %v260 = vadd.s32 %v259, 16
    %261 = vset.pattern.permute.xlu0 %v260
    %262 = vperm.xlu0 %261, %v245
    %v263 = vpop.permute.xlu0 %262
    %v264 = vlaneseq
    %v265 = vshrl.u32 %v264, 7
    %v266 = vadd.s32 %v265, 24
    %267 = vset.pattern.permute.xlu0 %v266
    %268 = vperm.xlu0 %267, %v245
    %v269 = vpop.permute.xlu0 %268
    %v270 = vlaneseq
    %v271 = vshrl.u32 %v270, 7
    %v272 = vadd.s32 %v271, 32
    %273 = vset.pattern.permute.xlu0 %v272
    %274 = vperm.xlu0 %273, %v245
    %v275 = vpop.permute.xlu0 %274
    %v276 = vlaneseq
    %v277 = vshrl.u32 %v276, 7
    %v278 = vadd.s32 %v277, 40
    %279 = vset.pattern.permute.xlu0 %v278
    %280 = vperm.xlu0 %279, %v245
    %v281 = vpop.permute.xlu0 %280
    %v282 = vlaneseq
    %v283 = vshrl.u32 %v282, 7
    %v284 = vadd.s32 %v283, 48
    %285 = vset.pattern.permute.xlu0 %v284
    %286 = vperm.xlu0 %285, %v245
    %v287 = vpop.permute.xlu0 %286
    %v288 = vlaneseq
    %v289 = vshrl.u32 %v288, 7
    %v290 = vadd.s32 %v289, 56
    %291 = vset.pattern.permute.xlu0 %v290
    %292 = vperm.xlu0 %291, %v245
    %v293 = vpop.permute.xlu0 %292
    %v294 = vlaneseq
    %v295 = vshrl.u32 %v294, 7
    %v296 = vadd.s32 %v295, 64
    %297 = vset.pattern.permute.xlu0 %v296
    %298 = vperm.xlu0 %297, %v245
    %v299 = vpop.permute.xlu0 %298
    %v300 = vlaneseq
    %v301 = vshrl.u32 %v300, 7
    %v302 = vadd.s32 %v301, 72
    %303 = vset.pattern.permute.xlu0 %v302
    %304 = vperm.xlu0 %303, %v245
    %v305 = vpop.permute.xlu0 %304
    %v306 = vlaneseq
    %v307 = vshrl.u32 %v306, 7
    %v308 = vadd.s32 %v307, 80
    %309 = vset.pattern.permute.xlu0 %v308
    %310 = vperm.xlu0 %309, %v245
    %v311 = vpop.permute.xlu0 %310
    %v312 = vlaneseq
    %v313 = vshrl.u32 %v312, 7
    %v314 = vadd.s32 %v313, 88
    %315 = vset.pattern.permute.xlu0 %v314
    %316 = vperm.xlu0 %315, %v245
    %v317 = vpop.permute.xlu0 %316
    %v318 = vlaneseq
    %v319 = vshrl.u32 %v318, 7
    %v320 = vadd.s32 %v319, 96
    %321 = vset.pattern.permute.xlu0 %v320
    %322 = vperm.xlu0 %321, %v245
    %v323 = vpop.permute.xlu0 %322
    %v324 = vlaneseq
    %v325 = vshrl.u32 %v324, 7
    %v326 = vadd.s32 %v325, 104
    %327 = vset.pattern.permute.xlu0 %v326
    %328 = vperm.xlu0 %327, %v245
    %v329 = vpop.permute.xlu0 %328
    %v330 = vlaneseq
    %v331 = vshrl.u32 %v330, 7
    %v332 = vadd.s32 %v331, 112
    %333 = vset.pattern.permute.xlu0 %v332
    %334 = vperm.xlu0 %333, %v245
    %v335 = vpop.permute.xlu0 %334
    %v336 = vlaneseq
    %v337 = vshrl.u32 %v336, 7
    %v338 = vadd.s32 %v337, 120
    %339 = vset.pattern.permute.xlu0 %v338
    %340 = vperm.xlu0 %339, %v245
    %v341 = vpop.permute.xlu0 %340
    %v342 = vperm.slane %v48, 3
    %v343 = vlaneseq
    %v344 = vshrl.u32 %v343, 7
    %346 = vset.pattern.permute.xlu0 %v344
    %347 = vperm.xlu0 %346, %v342
    %v348 = vpop.permute.xlu0 %347
    %v349 = vlaneseq
    %v350 = vshrl.u32 %v349, 7
    %v351 = vadd.s32 %v350, 8
    %352 = vset.pattern.permute.xlu0 %v351
    %353 = vperm.xlu0 %352, %v342
    %v354 = vpop.permute.xlu0 %353
    %v355 = vlaneseq
    %v356 = vshrl.u32 %v355, 7
    %v357 = vadd.s32 %v356, 16
    %358 = vset.pattern.permute.xlu0 %v357
    %359 = vperm.xlu0 %358, %v342
    %v360 = vpop.permute.xlu0 %359
    %v361 = vlaneseq
    %v362 = vshrl.u32 %v361, 7
    %v363 = vadd.s32 %v362, 24
    %364 = vset.pattern.permute.xlu0 %v363
    %365 = vperm.xlu0 %364, %v342
    %v366 = vpop.permute.xlu0 %365
    %v367 = vlaneseq
    %v368 = vshrl.u32 %v367, 7
    %v369 = vadd.s32 %v368, 32
    %370 = vset.pattern.permute.xlu0 %v369
    %371 = vperm.xlu0 %370, %v342
    %v372 = vpop.permute.xlu0 %371
    %v373 = vlaneseq
    %v374 = vshrl.u32 %v373, 7
    %v375 = vadd.s32 %v374, 40
    %376 = vset.pattern.permute.xlu0 %v375
    %377 = vperm.xlu0 %376, %v342
    %v378 = vpop.permute.xlu0 %377
    %v379 = vlaneseq
    %v380 = vshrl.u32 %v379, 7
    %v381 = vadd.s32 %v380, 48
    %382 = vset.pattern.permute.xlu0 %v381
    %383 = vperm.xlu0 %382, %v342
    %v384 = vpop.permute.xlu0 %383
    %v385 = vlaneseq
    %v386 = vshrl.u32 %v385, 7
    %v387 = vadd.s32 %v386, 56
    %388 = vset.pattern.permute.xlu0 %v387
    %389 = vperm.xlu0 %388, %v342
    %v390 = vpop.permute.xlu0 %389
    %v391 = vlaneseq
    %v392 = vshrl.u32 %v391, 7
    %v393 = vadd.s32 %v392, 64
    %394 = vset.pattern.permute.xlu0 %v393
    %395 = vperm.xlu0 %394, %v342
    %v396 = vpop.permute.xlu0 %395
    %v397 = vlaneseq
    %v398 = vshrl.u32 %v397, 7
    %v399 = vadd.s32 %v398, 72
    %400 = vset.pattern.permute.xlu0 %v399
    %401 = vperm.xlu0 %400, %v342
    %v402 = vpop.permute.xlu0 %401
    %v403 = vlaneseq
    %v404 = vshrl.u32 %v403, 7
    %v405 = vadd.s32 %v404, 80
    %406 = vset.pattern.permute.xlu0 %v405
    %407 = vperm.xlu0 %406, %v342
    %v408 = vpop.permute.xlu0 %407
    %v409 = vlaneseq
    %v410 = vshrl.u32 %v409, 7
    %v411 = vadd.s32 %v410, 88
    %412 = vset.pattern.permute.xlu0 %v411
    %413 = vperm.xlu0 %412, %v342
    %v414 = vpop.permute.xlu0 %413
    %v415 = vlaneseq
    %v416 = vshrl.u32 %v415, 7
    %v417 = vadd.s32 %v416, 96
    %418 = vset.pattern.permute.xlu0 %v417
    %419 = vperm.xlu0 %418, %v342
    %v420 = vpop.permute.xlu0 %419
    %v421 = vlaneseq
    %v422 = vshrl.u32 %v421, 7
    %v423 = vadd.s32 %v422, 104
    %424 = vset.pattern.permute.xlu0 %v423
    %425 = vperm.xlu0 %424, %v342
    %v426 = vpop.permute.xlu0 %425
    %v427 = vlaneseq
    %v428 = vshrl.u32 %v427, 7
    %v429 = vadd.s32 %v428, 112
    %430 = vset.pattern.permute.xlu0 %v429
    %431 = vperm.xlu0 %430, %v342
    %v432 = vpop.permute.xlu0 %431
    %v433 = vlaneseq
    %v434 = vshrl.u32 %v433, 7
    %v435 = vadd.s32 %v434, 120
    %436 = vset.pattern.permute.xlu0 %v435
    %437 = vperm.xlu0 %436, %v342
    %v438 = vpop.permute.xlu0 %437
    %v439 = vperm.slane %v48, 4
    %v440 = vlaneseq
    %v441 = vshrl.u32 %v440, 7
    %443 = vset.pattern.permute.xlu0 %v441
    %444 = vperm.xlu0 %443, %v439
    %v445 = vpop.permute.xlu0 %444
    %v446 = vlaneseq
    %v447 = vshrl.u32 %v446, 7
    %v448 = vadd.s32 %v447, 8
    %449 = vset.pattern.permute.xlu0 %v448
    %450 = vperm.xlu0 %449, %v439
    %v451 = vpop.permute.xlu0 %450
    %v452 = vlaneseq
    %v453 = vshrl.u32 %v452, 7
    %v454 = vadd.s32 %v453, 16
    %455 = vset.pattern.permute.xlu0 %v454
    %456 = vperm.xlu0 %455, %v439
    %v457 = vpop.permute.xlu0 %456
    %v458 = vlaneseq
    %v459 = vshrl.u32 %v458, 7
    %v460 = vadd.s32 %v459, 24
    %461 = vset.pattern.permute.xlu0 %v460
    %462 = vperm.xlu0 %461, %v439
    %v463 = vpop.permute.xlu0 %462
    %v464 = vlaneseq
    %v465 = vshrl.u32 %v464, 7
    %v466 = vadd.s32 %v465, 32
    %467 = vset.pattern.permute.xlu0 %v466
    %468 = vperm.xlu0 %467, %v439
    %v469 = vpop.permute.xlu0 %468
    %v470 = vlaneseq
    %v471 = vshrl.u32 %v470, 7
    %v472 = vadd.s32 %v471, 40
    %473 = vset.pattern.permute.xlu0 %v472
    %474 = vperm.xlu0 %473, %v439
    %v475 = vpop.permute.xlu0 %474
    %v476 = vlaneseq
    %v477 = vshrl.u32 %v476, 7
    %v478 = vadd.s32 %v477, 48
    %479 = vset.pattern.permute.xlu0 %v478
    %480 = vperm.xlu0 %479, %v439
    %v481 = vpop.permute.xlu0 %480
    %v482 = vlaneseq
    %v483 = vshrl.u32 %v482, 7
    %v484 = vadd.s32 %v483, 56
    %485 = vset.pattern.permute.xlu0 %v484
    %486 = vperm.xlu0 %485, %v439
    %v487 = vpop.permute.xlu0 %486
    %v488 = vlaneseq
    %v489 = vshrl.u32 %v488, 7
    %v490 = vadd.s32 %v489, 64
    %491 = vset.pattern.permute.xlu0 %v490
    %492 = vperm.xlu0 %491, %v439
    %v493 = vpop.permute.xlu0 %492
    %v494 = vlaneseq
    %v495 = vshrl.u32 %v494, 7
    %v496 = vadd.s32 %v495, 72
    %497 = vset.pattern.permute.xlu0 %v496
    %498 = vperm.xlu0 %497, %v439
    %v499 = vpop.permute.xlu0 %498
    %v500 = vlaneseq
    %v501 = vshrl.u32 %v500, 7
    %v502 = vadd.s32 %v501, 80
    %503 = vset.pattern.permute.xlu0 %v502
    %504 = vperm.xlu0 %503, %v439
    %v505 = vpop.permute.xlu0 %504
    %v506 = vlaneseq
    %v507 = vshrl.u32 %v506, 7
    %v508 = vadd.s32 %v507, 88
    %509 = vset.pattern.permute.xlu0 %v508
    %510 = vperm.xlu0 %509, %v439
    %v511 = vpop.permute.xlu0 %510
    %v512 = vlaneseq
    %v513 = vshrl.u32 %v512, 7
    %v514 = vadd.s32 %v513, 96
    %515 = vset.pattern.permute.xlu0 %v514
    %516 = vperm.xlu0 %515, %v439
    %v517 = vpop.permute.xlu0 %516
    %v518 = vlaneseq
    %v519 = vshrl.u32 %v518, 7
    %v520 = vadd.s32 %v519, 104
    %521 = vset.pattern.permute.xlu0 %v520
    %522 = vperm.xlu0 %521, %v439
    %v523 = vpop.permute.xlu0 %522
    %v524 = vlaneseq
    %v525 = vshrl.u32 %v524, 7
    %v526 = vadd.s32 %v525, 112
    %527 = vset.pattern.permute.xlu0 %v526
    %528 = vperm.xlu0 %527, %v439
    %v529 = vpop.permute.xlu0 %528
    %v530 = vlaneseq
    %v531 = vshrl.u32 %v530, 7
    %v532 = vadd.s32 %v531, 120
    %533 = vset.pattern.permute.xlu0 %v532
    %534 = vperm.xlu0 %533, %v439
    %v535 = vpop.permute.xlu0 %534
    %v536 = vperm.slane %v48, 5
    %v537 = vlaneseq
    %v538 = vshrl.u32 %v537, 7
    %540 = vset.pattern.permute.xlu0 %v538
    %541 = vperm.xlu0 %540, %v536
    %v542 = vpop.permute.xlu0 %541
    %v543 = vlaneseq
    %v544 = vshrl.u32 %v543, 7
    %v545 = vadd.s32 %v544, 8
    %546 = vset.pattern.permute.xlu0 %v545
    %547 = vperm.xlu0 %546, %v536
    %v548 = vpop.permute.xlu0 %547
    %v549 = vlaneseq
    %v550 = vshrl.u32 %v549, 7
    %v551 = vadd.s32 %v550, 16
    %552 = vset.pattern.permute.xlu0 %v551
    %553 = vperm.xlu0 %552, %v536
    %v554 = vpop.permute.xlu0 %553
    %v555 = vlaneseq
    %v556 = vshrl.u32 %v555, 7
    %v557 = vadd.s32 %v556, 24
    %558 = vset.pattern.permute.xlu0 %v557
    %559 = vperm.xlu0 %558, %v536
    %v560 = vpop.permute.xlu0 %559
    %v561 = vlaneseq
    %v562 = vshrl.u32 %v561, 7
    %v563 = vadd.s32 %v562, 32
    %564 = vset.pattern.permute.xlu0 %v563
    %565 = vperm.xlu0 %564, %v536
    %v566 = vpop.permute.xlu0 %565
    %v567 = vlaneseq
    %v568 = vshrl.u32 %v567, 7
    %v569 = vadd.s32 %v568, 40
    %570 = vset.pattern.permute.xlu0 %v569
    %571 = vperm.xlu0 %570, %v536
    %v572 = vpop.permute.xlu0 %571
    %v573 = vlaneseq
    %v574 = vshrl.u32 %v573, 7
    %v575 = vadd.s32 %v574, 48
    %576 = vset.pattern.permute.xlu0 %v575
    %577 = vperm.xlu0 %576, %v536
    %v578 = vpop.permute.xlu0 %577
    %v579 = vlaneseq
    %v580 = vshrl.u32 %v579, 7
    %v581 = vadd.s32 %v580, 56
    %582 = vset.pattern.permute.xlu0 %v581
    %583 = vperm.xlu0 %582, %v536
    %v584 = vpop.permute.xlu0 %583
    %v585 = vlaneseq
    %v586 = vshrl.u32 %v585, 7
    %v587 = vadd.s32 %v586, 64
    %588 = vset.pattern.permute.xlu0 %v587
    %589 = vperm.xlu0 %588, %v536
    %v590 = vpop.permute.xlu0 %589
    %v591 = vlaneseq
    %v592 = vshrl.u32 %v591, 7
    %v593 = vadd.s32 %v592, 72
    %594 = vset.pattern.permute.xlu0 %v593
    %595 = vperm.xlu0 %594, %v536
    %v596 = vpop.permute.xlu0 %595
    %v597 = vlaneseq
    %v598 = vshrl.u32 %v597, 7
    %v599 = vadd.s32 %v598, 80
    %600 = vset.pattern.permute.xlu0 %v599
    %601 = vperm.xlu0 %600, %v536
    %v602 = vpop.permute.xlu0 %601
    %v603 = vlaneseq
    %v604 = vshrl.u32 %v603, 7
    %v605 = vadd.s32 %v604, 88
    %606 = vset.pattern.permute.xlu0 %v605
    %607 = vperm.xlu0 %606, %v536
    %v608 = vpop.permute.xlu0 %607
    %v609 = vlaneseq
    %v610 = vshrl.u32 %v609, 7
    %v611 = vadd.s32 %v610, 96
    %612 = vset.pattern.permute.xlu0 %v611
    %613 = vperm.xlu0 %612, %v536
    %v614 = vpop.permute.xlu0 %613
    %v615 = vlaneseq
    %v616 = vshrl.u32 %v615, 7
    %v617 = vadd.s32 %v616, 104
    %618 = vset.pattern.permute.xlu0 %v617
    %619 = vperm.xlu0 %618, %v536
    %v620 = vpop.permute.xlu0 %619
    %v621 = vlaneseq
    %v622 = vshrl.u32 %v621, 7
    %v623 = vadd.s32 %v622, 112
    %624 = vset.pattern.permute.xlu0 %v623
    %625 = vperm.xlu0 %624, %v536
    %v626 = vpop.permute.xlu0 %625
    %v627 = vlaneseq
    %v628 = vshrl.u32 %v627, 7
    %v629 = vadd.s32 %v628, 120
    %630 = vset.pattern.permute.xlu0 %v629
    %631 = vperm.xlu0 %630, %v536
    %v632 = vpop.permute.xlu0 %631
    %v633 = vperm.slane %v48, 6
    %v634 = vlaneseq
    %v635 = vshrl.u32 %v634, 7
    %637 = vset.pattern.permute.xlu0 %v635
    %638 = vperm.xlu0 %637, %v633
    %v639 = vpop.permute.xlu0 %638
    %v640 = vlaneseq
    %v641 = vshrl.u32 %v640, 7
    %v642 = vadd.s32 %v641, 8
    %643 = vset.pattern.permute.xlu0 %v642
    %644 = vperm.xlu0 %643, %v633
    %v645 = vpop.permute.xlu0 %644
    %v646 = vlaneseq
    %v647 = vshrl.u32 %v646, 7
    %v648 = vadd.s32 %v647, 16
    %649 = vset.pattern.permute.xlu0 %v648
    %650 = vperm.xlu0 %649, %v633
    %v651 = vpop.permute.xlu0 %650
    %v652 = vlaneseq
    %v653 = vshrl.u32 %v652, 7
    %v654 = vadd.s32 %v653, 24
    %655 = vset.pattern.permute.xlu0 %v654
    %656 = vperm.xlu0 %655, %v633
    %v657 = vpop.permute.xlu0 %656
    %v658 = vlaneseq
    %v659 = vshrl.u32 %v658, 7
    %v660 = vadd.s32 %v659, 32
    %661 = vset.pattern.permute.xlu0 %v660
    %662 = vperm.xlu0 %661, %v633
    %v663 = vpop.permute.xlu0 %662
    %v664 = vlaneseq
    %v665 = vshrl.u32 %v664, 7
    %v666 = vadd.s32 %v665, 40
    %667 = vset.pattern.permute.xlu0 %v666
    %668 = vperm.xlu0 %667, %v633
    %v669 = vpop.permute.xlu0 %668
    %v670 = vlaneseq
    %v671 = vshrl.u32 %v670, 7
    %v672 = vadd.s32 %v671, 48
    %673 = vset.pattern.permute.xlu0 %v672
    %674 = vperm.xlu0 %673, %v633
    %v675 = vpop.permute.xlu0 %674
    %v676 = vlaneseq
    %v677 = vshrl.u32 %v676, 7
    %v678 = vadd.s32 %v677, 56
    %679 = vset.pattern.permute.xlu0 %v678
    %680 = vperm.xlu0 %679, %v633
    %v681 = vpop.permute.xlu0 %680
    %v682 = vlaneseq
    %v683 = vshrl.u32 %v682, 7
    %v684 = vadd.s32 %v683, 64
    %685 = vset.pattern.permute.xlu0 %v684
    %686 = vperm.xlu0 %685, %v633
    %v687 = vpop.permute.xlu0 %686
    %v688 = vlaneseq
    %v689 = vshrl.u32 %v688, 7
    %v690 = vadd.s32 %v689, 72
    %691 = vset.pattern.permute.xlu0 %v690
    %692 = vperm.xlu0 %691, %v633
    %v693 = vpop.permute.xlu0 %692
    %v694 = vlaneseq
    %v695 = vshrl.u32 %v694, 7
    %v696 = vadd.s32 %v695, 80
    %697 = vset.pattern.permute.xlu0 %v696
    %698 = vperm.xlu0 %697, %v633
    %v699 = vpop.permute.xlu0 %698
    %v700 = vlaneseq
    %v701 = vshrl.u32 %v700, 7
    %v702 = vadd.s32 %v701, 88
    %703 = vset.pattern.permute.xlu0 %v702
    %704 = vperm.xlu0 %703, %v633
    %v705 = vpop.permute.xlu0 %704
    %v706 = vlaneseq
    %v707 = vshrl.u32 %v706, 7
    %v708 = vadd.s32 %v707, 96
    %709 = vset.pattern.permute.xlu0 %v708
    %710 = vperm.xlu0 %709, %v633
    %v711 = vpop.permute.xlu0 %710
    %v712 = vlaneseq
    %v713 = vshrl.u32 %v712, 7
    %v714 = vadd.s32 %v713, 104
    %715 = vset.pattern.permute.xlu0 %v714
    %716 = vperm.xlu0 %715, %v633
    %v717 = vpop.permute.xlu0 %716
    %v718 = vlaneseq
    %v719 = vshrl.u32 %v718, 7
    %v720 = vadd.s32 %v719, 112
    %721 = vset.pattern.permute.xlu0 %v720
    %722 = vperm.xlu0 %721, %v633
    %v723 = vpop.permute.xlu0 %722
    %v724 = vlaneseq
    %v725 = vshrl.u32 %v724, 7
    %v726 = vadd.s32 %v725, 120
    %727 = vset.pattern.permute.xlu0 %v726
    %728 = vperm.xlu0 %727, %v633
    %v729 = vpop.permute.xlu0 %728
    %v730 = vperm.slane %v48, 7
    %v731 = vlaneseq
    %v732 = vshrl.u32 %v731, 7
    %734 = vset.pattern.permute.xlu0 %v732
    %735 = vperm.xlu0 %734, %v730
    %v736 = vpop.permute.xlu0 %735
    %v737 = vlaneseq
    %v738 = vshrl.u32 %v737, 7
    %v739 = vadd.s32 %v738, 8
    %740 = vset.pattern.permute.xlu0 %v739
    %741 = vperm.xlu0 %740, %v730
    %v742 = vpop.permute.xlu0 %741
    %v743 = vlaneseq
    %v744 = vshrl.u32 %v743, 7
    %v745 = vadd.s32 %v744, 16
    %746 = vset.pattern.permute.xlu0 %v745
    %747 = vperm.xlu0 %746, %v730
    %v748 = vpop.permute.xlu0 %747
    %v749 = vlaneseq
    %v750 = vshrl.u32 %v749, 7
    %v751 = vadd.s32 %v750, 24
    %752 = vset.pattern.permute.xlu0 %v751
    %753 = vperm.xlu0 %752, %v730
    %v754 = vpop.permute.xlu0 %753
    %v755 = vlaneseq
    %v756 = vshrl.u32 %v755, 7
    %v757 = vadd.s32 %v756, 32
    %758 = vset.pattern.permute.xlu0 %v757
    %759 = vperm.xlu0 %758, %v730
    %v760 = vpop.permute.xlu0 %759
    %v761 = vlaneseq
    %v762 = vshrl.u32 %v761, 7
    %v763 = vadd.s32 %v762, 40
    %764 = vset.pattern.permute.xlu0 %v763
    %765 = vperm.xlu0 %764, %v730
    %v766 = vpop.permute.xlu0 %765
    %v767 = vlaneseq
    %v768 = vshrl.u32 %v767, 7
    %v769 = vadd.s32 %v768, 48
    %770 = vset.pattern.permute.xlu0 %v769
    %771 = vperm.xlu0 %770, %v730
    %v772 = vpop.permute.xlu0 %771
    %v773 = vlaneseq
    %v774 = vshrl.u32 %v773, 7
    %v775 = vadd.s32 %v774, 56
    %776 = vset.pattern.permute.xlu0 %v775
    %777 = vperm.xlu0 %776, %v730
    %v778 = vpop.permute.xlu0 %777
    %v779 = vlaneseq
    %v780 = vshrl.u32 %v779, 7
    %v781 = vadd.s32 %v780, 64
    %782 = vset.pattern.permute.xlu0 %v781
    %783 = vperm.xlu0 %782, %v730
    %v784 = vpop.permute.xlu0 %783
    %v785 = vlaneseq
    %v786 = vshrl.u32 %v785, 7
    %v787 = vadd.s32 %v786, 72
    %788 = vset.pattern.permute.xlu0 %v787
    %789 = vperm.xlu0 %788, %v730
    %v790 = vpop.permute.xlu0 %789
    %v791 = vlaneseq
    %v792 = vshrl.u32 %v791, 7
    %v793 = vadd.s32 %v792, 80
    %794 = vset.pattern.permute.xlu0 %v793
    %795 = vperm.xlu0 %794, %v730
    %v796 = vpop.permute.xlu0 %795
    %v797 = vlaneseq
    %v798 = vshrl.u32 %v797, 7
    %v799 = vadd.s32 %v798, 88
    %800 = vset.pattern.permute.xlu0 %v799
    %801 = vperm.xlu0 %800, %v730
    %v802 = vpop.permute.xlu0 %801
    %v803 = vlaneseq
    %v804 = vshrl.u32 %v803, 7
    %v805 = vadd.s32 %v804, 96
    %806 = vset.pattern.permute.xlu0 %v805
    %807 = vperm.xlu0 %806, %v730
    %v808 = vpop.permute.xlu0 %807
    %v809 = vlaneseq
    %v810 = vshrl.u32 %v809, 7
    %v811 = vadd.s32 %v810, 104
    %812 = vset.pattern.permute.xlu0 %v811
    %813 = vperm.xlu0 %812, %v730
    %v814 = vpop.permute.xlu0 %813
    %v815 = vlaneseq
    %v816 = vshrl.u32 %v815, 7
    %v817 = vadd.s32 %v816, 112
    %818 = vset.pattern.permute.xlu0 %v817
    %819 = vperm.xlu0 %818, %v730
    %v820 = vpop.permute.xlu0 %819
    %v821 = vlaneseq
    %v822 = vshrl.u32 %v821, 7
    %v823 = vadd.s32 %v822, 120
    %824 = vset.pattern.permute.xlu0 %v823
    %825 = vperm.xlu0 %824, %v730
    %v826 = vpop.permute.xlu0 %825
    %vm827 = vcmp.eq.s32.totalorder %v57, %v50
    %vm828 = vcmp.eq.s32.totalorder %v63, %v50
    %vm829 = vcmp.eq.s32.totalorder %v69, %v50
    %vm830 = vcmp.eq.s32.totalorder %v75, %v50
    %vm831 = vcmp.eq.s32.totalorder %v81, %v50
    %vm832 = vcmp.eq.s32.totalorder %v87, %v50
    %vm833 = vcmp.eq.s32.totalorder %v93, %v50
    %vm834 = vcmp.eq.s32.totalorder %v99, %v50
    %vm835 = vcmp.eq.s32.totalorder %v105, %v50
    %vm836 = vcmp.eq.s32.totalorder %v111, %v50
    %vm837 = vcmp.eq.s32.totalorder %v117, %v50
    %vm838 = vcmp.eq.s32.totalorder %v123, %v50
    %vm839 = vcmp.eq.s32.totalorder %v129, %v50
    %vm840 = vcmp.eq.s32.totalorder %v135, %v50
    %vm841 = vcmp.eq.s32.totalorder %v141, %v50
    %vm842 = vcmp.eq.s32.totalorder %v147, %v50
    %vm843 = vcmp.eq.s32.totalorder %v154, %v50
    %vm844 = vcmp.eq.s32.totalorder %v160, %v50
    %vm845 = vcmp.eq.s32.totalorder %v166, %v50
    %vm846 = vcmp.eq.s32.totalorder %v172, %v50
    %vm847 = vcmp.eq.s32.totalorder %v178, %v50
    %vm848 = vcmp.eq.s32.totalorder %v184, %v50
    %vm849 = vcmp.eq.s32.totalorder %v190, %v50
    %vm850 = vcmp.eq.s32.totalorder %v196, %v50
    %vm851 = vcmp.eq.s32.totalorder %v202, %v50
    %vm852 = vcmp.eq.s32.totalorder %v208, %v50
    %vm853 = vcmp.eq.s32.totalorder %v214, %v50
    %vm854 = vcmp.eq.s32.totalorder %v220, %v50
    %vm855 = vcmp.eq.s32.totalorder %v226, %v50
    %vm856 = vcmp.eq.s32.totalorder %v232, %v50
    %vm857 = vcmp.eq.s32.totalorder %v238, %v50
    %vm858 = vcmp.eq.s32.totalorder %v244, %v50
    %vm859 = vcmp.eq.s32.totalorder %v251, %v50
    %vm860 = vcmp.eq.s32.totalorder %v257, %v50
    %vm861 = vcmp.eq.s32.totalorder %v263, %v50
    %vm862 = vcmp.eq.s32.totalorder %v269, %v50
    %vm863 = vcmp.eq.s32.totalorder %v275, %v50
    %vm864 = vcmp.eq.s32.totalorder %v281, %v50
    %vm865 = vcmp.eq.s32.totalorder %v287, %v50
    %vm866 = vcmp.eq.s32.totalorder %v293, %v50
    %vm867 = vcmp.eq.s32.totalorder %v299, %v50
    %vm868 = vcmp.eq.s32.totalorder %v305, %v50
    %vm869 = vcmp.eq.s32.totalorder %v311, %v50
    %vm870 = vcmp.eq.s32.totalorder %v317, %v50
    %vm871 = vcmp.eq.s32.totalorder %v323, %v50
    %vm872 = vcmp.eq.s32.totalorder %v329, %v50
    %vm873 = vcmp.eq.s32.totalorder %v335, %v50
    %vm874 = vcmp.eq.s32.totalorder %v341, %v50
    %vm875 = vcmp.eq.s32.totalorder %v348, %v50
    %vm876 = vcmp.eq.s32.totalorder %v354, %v50
    %vm877 = vcmp.eq.s32.totalorder %v360, %v50
    %vm878 = vcmp.eq.s32.totalorder %v366, %v50
    %vm879 = vcmp.eq.s32.totalorder %v372, %v50
    %vm880 = vcmp.eq.s32.totalorder %v378, %v50
    %vm881 = vcmp.eq.s32.totalorder %v384, %v50
    %vm882 = vcmp.eq.s32.totalorder %v390, %v50
    %vm883 = vcmp.eq.s32.totalorder %v396, %v50
    %vm884 = vcmp.eq.s32.totalorder %v402, %v50
    %vm885 = vcmp.eq.s32.totalorder %v408, %v50
    %vm886 = vcmp.eq.s32.totalorder %v414, %v50
    %vm887 = vcmp.eq.s32.totalorder %v420, %v50
    %vm888 = vcmp.eq.s32.totalorder %v426, %v50
    %vm889 = vcmp.eq.s32.totalorder %v432, %v50
    %vm890 = vcmp.eq.s32.totalorder %v438, %v50
    %vm891 = vcmp.eq.s32.totalorder %v445, %v50
    %vm892 = vcmp.eq.s32.totalorder %v451, %v50
    %vm893 = vcmp.eq.s32.totalorder %v457, %v50
    %vm894 = vcmp.eq.s32.totalorder %v463, %v50
    %vm895 = vcmp.eq.s32.totalorder %v469, %v50
    %vm896 = vcmp.eq.s32.totalorder %v475, %v50
    %vm897 = vcmp.eq.s32.totalorder %v481, %v50
    %vm898 = vcmp.eq.s32.totalorder %v487, %v50
    %vm899 = vcmp.eq.s32.totalorder %v493, %v50
    %vm900 = vcmp.eq.s32.totalorder %v499, %v50
    %vm901 = vcmp.eq.s32.totalorder %v505, %v50
    %vm902 = vcmp.eq.s32.totalorder %v511, %v50
    %vm903 = vcmp.eq.s32.totalorder %v517, %v50
    %vm904 = vcmp.eq.s32.totalorder %v523, %v50
    %vm905 = vcmp.eq.s32.totalorder %v529, %v50
    %vm906 = vcmp.eq.s32.totalorder %v535, %v50
    %vm907 = vcmp.eq.s32.totalorder %v542, %v50
    %vm908 = vcmp.eq.s32.totalorder %v548, %v50
    %vm909 = vcmp.eq.s32.totalorder %v554, %v50
    %vm910 = vcmp.eq.s32.totalorder %v560, %v50
    %vm911 = vcmp.eq.s32.totalorder %v566, %v50
    %vm912 = vcmp.eq.s32.totalorder %v572, %v50
    %vm913 = vcmp.eq.s32.totalorder %v578, %v50
    %vm914 = vcmp.eq.s32.totalorder %v584, %v50
    %vm915 = vcmp.eq.s32.totalorder %v590, %v50
    %vm916 = vcmp.eq.s32.totalorder %v596, %v50
    %vm917 = vcmp.eq.s32.totalorder %v602, %v50
    %vm918 = vcmp.eq.s32.totalorder %v608, %v50
    %vm919 = vcmp.eq.s32.totalorder %v614, %v50
    %vm920 = vcmp.eq.s32.totalorder %v620, %v50
    %vm921 = vcmp.eq.s32.totalorder %v626, %v50
    %vm922 = vcmp.eq.s32.totalorder %v632, %v50
    %vm923 = vcmp.eq.s32.totalorder %v639, %v50
    %vm924 = vcmp.eq.s32.totalorder %v645, %v50
    %vm925 = vcmp.eq.s32.totalorder %v651, %v50
    %vm926 = vcmp.eq.s32.totalorder %v657, %v50
    %vm927 = vcmp.eq.s32.totalorder %v663, %v50
    %vm928 = vcmp.eq.s32.totalorder %v669, %v50
    %vm929 = vcmp.eq.s32.totalorder %v675, %v50
    %vm930 = vcmp.eq.s32.totalorder %v681, %v50
    %vm931 = vcmp.eq.s32.totalorder %v687, %v50
    %vm932 = vcmp.eq.s32.totalorder %v693, %v50
    %vm933 = vcmp.eq.s32.totalorder %v699, %v50
    %vm934 = vcmp.eq.s32.totalorder %v705, %v50
    %vm935 = vcmp.eq.s32.totalorder %v711, %v50
    %vm936 = vcmp.eq.s32.totalorder %v717, %v50
    %vm937 = vcmp.eq.s32.totalorder %v723, %v50
    %vm938 = vcmp.eq.s32.totalorder %v729, %v50
    %vm939 = vcmp.eq.s32.totalorder %v736, %v50
    %vm940 = vcmp.eq.s32.totalorder %v742, %v50
    %vm941 = vcmp.eq.s32.totalorder %v748, %v50
    %vm942 = vcmp.eq.s32.totalorder %v754, %v50
    %vm943 = vcmp.eq.s32.totalorder %v760, %v50
    %vm944 = vcmp.eq.s32.totalorder %v766, %v50
    %vm945 = vcmp.eq.s32.totalorder %v772, %v50
    %vm946 = vcmp.eq.s32.totalorder %v778, %v50
    %vm947 = vcmp.eq.s32.totalorder %v784, %v50
    %vm948 = vcmp.eq.s32.totalorder %v790, %v50
    %vm949 = vcmp.eq.s32.totalorder %v796, %v50
    %vm950 = vcmp.eq.s32.totalorder %v802, %v50
    %vm951 = vcmp.eq.s32.totalorder %v808, %v50
    %vm952 = vcmp.eq.s32.totalorder %v814, %v50
    %vm953 = vcmp.eq.s32.totalorder %v820, %v50
    %vm954 = vcmp.eq.s32.totalorder %v826, %v50
    %v955 = vsel %vm827, 1, 0
    %v956 = vsel %vm828, 1, 0
    %v957 = vsel %vm829, 1, 0
    %v958 = vsel %vm830, 1, 0
    %v959 = vsel %vm831, 1, 0
    %v960 = vsel %vm832, 1, 0
    %v961 = vsel %vm833, 1, 0
    %v962 = vsel %vm834, 1, 0
    %v963 = vsel %vm835, 1, 0
    %v964 = vsel %vm836, 1, 0
    %v965 = vsel %vm837, 1, 0
    %v966 = vsel %vm838, 1, 0
    %v967 = vsel %vm839, 1, 0
    %v968 = vsel %vm840, 1, 0
    %v969 = vsel %vm841, 1, 0
    %v970 = vsel %vm842, 1, 0
    %v971 = vsel %vm843, 1, 0
    %v972 = vsel %vm844, 1, 0
    %v973 = vsel %vm845, 1, 0
    %v974 = vsel %vm846, 1, 0
    %v975 = vsel %vm847, 1, 0
    %v976 = vsel %vm848, 1, 0
    %v977 = vsel %vm849, 1, 0
    %v978 = vsel %vm850, 1, 0
    %v979 = vsel %vm851, 1, 0
    %v980 = vsel %vm852, 1, 0
    %v981 = vsel %vm853, 1, 0
    %v982 = vsel %vm854, 1, 0
    %v983 = vsel %vm855, 1, 0
    %v984 = vsel %vm856, 1, 0
    %v985 = vsel %vm857, 1, 0
    %v986 = vsel %vm858, 1, 0
    %v987 = vsel %vm859, 1, 0
    %v988 = vsel %vm860, 1, 0
    %v989 = vsel %vm861, 1, 0
    %v990 = vsel %vm862, 1, 0
    %v991 = vsel %vm863, 1, 0
    %v992 = vsel %vm864, 1, 0
    %v993 = vsel %vm865, 1, 0
    %v994 = vsel %vm866, 1, 0
    %v995 = vsel %vm867, 1, 0
    %v996 = vsel %vm868, 1, 0
    %v997 = vsel %vm869, 1, 0
    %v998 = vsel %vm870, 1, 0
    %v999 = vsel %vm871, 1, 0
    %v1000 = vsel %vm872, 1, 0
    %v1001 = vsel %vm873, 1, 0
    %v1002 = vsel %vm874, 1, 0
    %v1003 = vsel %vm875, 1, 0
    %v1004 = vsel %vm876, 1, 0
    %v1005 = vsel %vm877, 1, 0
    %v1006 = vsel %vm878, 1, 0
    %v1007 = vsel %vm879, 1, 0
    %v1008 = vsel %vm880, 1, 0
    %v1009 = vsel %vm881, 1, 0
    %v1010 = vsel %vm882, 1, 0
    %v1011 = vsel %vm883, 1, 0
    %v1012 = vsel %vm884, 1, 0
    %v1013 = vsel %vm885, 1, 0
    %v1014 = vsel %vm886, 1, 0
    %v1015 = vsel %vm887, 1, 0
    %v1016 = vsel %vm888, 1, 0
    %v1017 = vsel %vm889, 1, 0
    %v1018 = vsel %vm890, 1, 0
    %v1019 = vsel %vm891, 1, 0
    %v1020 = vsel %vm892, 1, 0
    %v1021 = vsel %vm893, 1, 0
    %v1022 = vsel %vm894, 1, 0
    %v1023 = vsel %vm895, 1, 0
    %v1024 = vsel %vm896, 1, 0
    %v1025 = vsel %vm897, 1, 0
    %v1026 = vsel %vm898, 1, 0
    %v1027 = vsel %vm899, 1, 0
    %v1028 = vsel %vm900, 1, 0
    %v1029 = vsel %vm901, 1, 0
    %v1030 = vsel %vm902, 1, 0
    %v1031 = vsel %vm903, 1, 0
    %v1032 = vsel %vm904, 1, 0
    %v1033 = vsel %vm905, 1, 0
    %v1034 = vsel %vm906, 1, 0
    %v1035 = vsel %vm907, 1, 0
    %v1036 = vsel %vm908, 1, 0
    %v1037 = vsel %vm909, 1, 0
    %v1038 = vsel %vm910, 1, 0
    %v1039 = vsel %vm911, 1, 0
    %v1040 = vsel %vm912, 1, 0
    %v1041 = vsel %vm913, 1, 0
    %v1042 = vsel %vm914, 1, 0
    %v1043 = vsel %vm915, 1, 0
    %v1044 = vsel %vm916, 1, 0
    %v1045 = vsel %vm917, 1, 0
    %v1046 = vsel %vm918, 1, 0
    %v1047 = vsel %vm919, 1, 0
    %v1048 = vsel %vm920, 1, 0
    %v1049 = vsel %vm921, 1, 0
    %v1050 = vsel %vm922, 1, 0
    %v1051 = vsel %vm923, 1, 0
    %v1052 = vsel %vm924, 1, 0
    %v1053 = vsel %vm925, 1, 0
    %v1054 = vsel %vm926, 1, 0
    %v1055 = vsel %vm927, 1, 0
    %v1056 = vsel %vm928, 1, 0
    %v1057 = vsel %vm929, 1, 0
    %v1058 = vsel %vm930, 1, 0
    %v1059 = vsel %vm931, 1, 0
    %v1060 = vsel %vm932, 1, 0
    %v1061 = vsel %vm933, 1, 0
    %v1062 = vsel %vm934, 1, 0
    %v1063 = vsel %vm935, 1, 0
    %v1064 = vsel %vm936, 1, 0
    %v1065 = vsel %vm937, 1, 0
    %v1066 = vsel %vm938, 1, 0
    %v1067 = vsel %vm939, 1, 0
    %v1068 = vsel %vm940, 1, 0
    %v1069 = vsel %vm941, 1, 0
    %v1070 = vsel %vm942, 1, 0
    %v1071 = vsel %vm943, 1, 0
    %v1072 = vsel %vm944, 1, 0
    %v1073 = vsel %vm945, 1, 0
    %v1074 = vsel %vm946, 1, 0
    %v1075 = vsel %vm947, 1, 0
    %v1076 = vsel %vm948, 1, 0
    %v1077 = vsel %vm949, 1, 0
    %v1078 = vsel %vm950, 1, 0
    %v1079 = vsel %vm951, 1, 0
    %v1080 = vsel %vm952, 1, 0
    %v1081 = vsel %vm953, 1, 0
    %v1082 = vsel %vm954, 1, 0
    %v1083 = vcvt.s32.f32 %v955
    %v1084 = vcvt.s32.f32 %v956
    %v1085 = vcvt.s32.f32 %v957
    %v1086 = vcvt.s32.f32 %v958
    %v1087 = vcvt.s32.f32 %v959
    %v1088 = vcvt.s32.f32 %v960
    %v1089 = vcvt.s32.f32 %v961
    %v1090 = vcvt.s32.f32 %v962
    %v1091 = vcvt.s32.f32 %v963
    %v1092 = vcvt.s32.f32 %v964
    %v1093 = vcvt.s32.f32 %v965
    %v1094 = vcvt.s32.f32 %v966
    %v1095 = vcvt.s32.f32 %v967
    %v1096 = vcvt.s32.f32 %v968
    %v1097 = vcvt.s32.f32 %v969
    %v1098 = vcvt.s32.f32 %v970
    %v1099 = vcvt.s32.f32 %v971
    %v1100 = vcvt.s32.f32 %v972
    %v1101 = vcvt.s32.f32 %v973
    %v1102 = vcvt.s32.f32 %v974
    %v1103 = vcvt.s32.f32 %v975
    %v1104 = vcvt.s32.f32 %v976
    %v1105 = vcvt.s32.f32 %v977
    %v1106 = vcvt.s32.f32 %v978
    %v1107 = vcvt.s32.f32 %v979
    %v1108 = vcvt.s32.f32 %v980
    %v1109 = vcvt.s32.f32 %v981
    %v1110 = vcvt.s32.f32 %v982
    %v1111 = vcvt.s32.f32 %v983
    %v1112 = vcvt.s32.f32 %v984
    %v1113 = vcvt.s32.f32 %v985
    %v1114 = vcvt.s32.f32 %v986
    %v1115 = vcvt.s32.f32 %v987
    %v1116 = vcvt.s32.f32 %v988
    %v1117 = vcvt.s32.f32 %v989
    %v1118 = vcvt.s32.f32 %v990
    %v1119 = vcvt.s32.f32 %v991
    %v1120 = vcvt.s32.f32 %v992
    %v1121 = vcvt.s32.f32 %v993
    %v1122 = vcvt.s32.f32 %v994
    %v1123 = vcvt.s32.f32 %v995
    %v1124 = vcvt.s32.f32 %v996
    %v1125 = vcvt.s32.f32 %v997
    %v1126 = vcvt.s32.f32 %v998
    %v1127 = vcvt.s32.f32 %v999
    %v1128 = vcvt.s32.f32 %v1000
    %v1129 = vcvt.s32.f32 %v1001
    %v1130 = vcvt.s32.f32 %v1002
    %v1131 = vcvt.s32.f32 %v1003
    %v1132 = vcvt.s32.f32 %v1004
    %v1133 = vcvt.s32.f32 %v1005
    %v1134 = vcvt.s32.f32 %v1006
    %v1135 = vcvt.s32.f32 %v1007
    %v1136 = vcvt.s32.f32 %v1008
    %v1137 = vcvt.s32.f32 %v1009
    %v1138 = vcvt.s32.f32 %v1010
    %v1139 = vcvt.s32.f32 %v1011
    %v1140 = vcvt.s32.f32 %v1012
    %v1141 = vcvt.s32.f32 %v1013
    %v1142 = vcvt.s32.f32 %v1014
    %v1143 = vcvt.s32.f32 %v1015
    %v1144 = vcvt.s32.f32 %v1016
    %v1145 = vcvt.s32.f32 %v1017
    %v1146 = vcvt.s32.f32 %v1018
    %v1147 = vcvt.s32.f32 %v1019
    %v1148 = vcvt.s32.f32 %v1020
    %v1149 = vcvt.s32.f32 %v1021
    %v1150 = vcvt.s32.f32 %v1022
    %v1151 = vcvt.s32.f32 %v1023
    %v1152 = vcvt.s32.f32 %v1024
    %v1153 = vcvt.s32.f32 %v1025
    %v1154 = vcvt.s32.f32 %v1026
    %v1155 = vcvt.s32.f32 %v1027
    %v1156 = vcvt.s32.f32 %v1028
    %v1157 = vcvt.s32.f32 %v1029
    %v1158 = vcvt.s32.f32 %v1030
    %v1159 = vcvt.s32.f32 %v1031
    %v1160 = vcvt.s32.f32 %v1032
    %v1161 = vcvt.s32.f32 %v1033
    %v1162 = vcvt.s32.f32 %v1034
    %v1163 = vcvt.s32.f32 %v1035
    %v1164 = vcvt.s32.f32 %v1036
    %v1165 = vcvt.s32.f32 %v1037
    %v1166 = vcvt.s32.f32 %v1038
    %v1167 = vcvt.s32.f32 %v1039
    %v1168 = vcvt.s32.f32 %v1040
    %v1169 = vcvt.s32.f32 %v1041
    %v1170 = vcvt.s32.f32 %v1042
    %v1171 = vcvt.s32.f32 %v1043
    %v1172 = vcvt.s32.f32 %v1044
    %v1173 = vcvt.s32.f32 %v1045
    %v1174 = vcvt.s32.f32 %v1046
    %v1175 = vcvt.s32.f32 %v1047
    %v1176 = vcvt.s32.f32 %v1048
    %v1177 = vcvt.s32.f32 %v1049
    %v1178 = vcvt.s32.f32 %v1050
    %v1179 = vcvt.s32.f32 %v1051
    %v1180 = vcvt.s32.f32 %v1052
    %v1181 = vcvt.s32.f32 %v1053
    %v1182 = vcvt.s32.f32 %v1054
    %v1183 = vcvt.s32.f32 %v1055
    %v1184 = vcvt.s32.f32 %v1056
    %v1185 = vcvt.s32.f32 %v1057
    %v1186 = vcvt.s32.f32 %v1058
    %v1187 = vcvt.s32.f32 %v1059
    %v1188 = vcvt.s32.f32 %v1060
    %v1189 = vcvt.s32.f32 %v1061
    %v1190 = vcvt.s32.f32 %v1062
    %v1191 = vcvt.s32.f32 %v1063
    %v1192 = vcvt.s32.f32 %v1064
    %v1193 = vcvt.s32.f32 %v1065
    %v1194 = vcvt.s32.f32 %v1066
    %v1195 = vcvt.s32.f32 %v1067
    %v1196 = vcvt.s32.f32 %v1068
    %v1197 = vcvt.s32.f32 %v1069
    %v1198 = vcvt.s32.f32 %v1070
    %v1199 = vcvt.s32.f32 %v1071
    %v1200 = vcvt.s32.f32 %v1072
    %v1201 = vcvt.s32.f32 %v1073
    %v1202 = vcvt.s32.f32 %v1074
    %v1203 = vcvt.s32.f32 %v1075
    %v1204 = vcvt.s32.f32 %v1076
    %v1205 = vcvt.s32.f32 %v1077
    %v1206 = vcvt.s32.f32 %v1078
    %v1207 = vcvt.s32.f32 %v1079
    %v1208 = vcvt.s32.f32 %v1080
    %v1209 = vcvt.s32.f32 %v1081
    %v1210 = vcvt.s32.f32 %v1082
    %v1211 = vld [vmem:[#allocation2] sm:$0xff]
    %v1212 = vadd.f32 %v1083, %v1084
    %v1213 = vadd.f32 %v1212, %v1085
    %v1214 = vadd.f32 %v1213, %v1086
    %v1215 = vadd.f32 %v1214, %v1087
    %v1216 = vadd.f32 %v1215, %v1088
    %v1217 = vadd.f32 %v1216, %v1089
    %v1218 = vadd.f32 %v1217, %v1090
    %v1219 = vadd.f32 %v1218, %v1091
    %v1220 = vadd.f32 %v1219, %v1092
    %v1221 = vadd.f32 %v1220, %v1093
    %v1222 = vadd.f32 %v1221, %v1094
    %v1223 = vadd.f32 %v1222, %v1095
    %v1224 = vadd.f32 %v1223, %v1096
    %v1225 = vadd.f32 %v1224, %v1097
    %v1226 = vadd.f32 %v1225, %v1098
    %v1227 = vrot.slane %v1226, 4
    %v1228 = vadd.f32 %v1226, %v1227
    %v1229 = vrot.slane %v1228, 2
    %v1230 = vadd.f32 %v1228, %v1229
    %v1231 = vrot.slane %v1230, 1
    %v1232 = vadd.f32 %v1230, %v1231
    %v1233 = vadd.f32 %v1099, %v1100
    %v1234 = vadd.f32 %v1233, %v1101
    %v1235 = vadd.f32 %v1234, %v1102
    %v1236 = vadd.f32 %v1235, %v1103
    %v1237 = vadd.f32 %v1236, %v1104
    %v1238 = vadd.f32 %v1237, %v1105
    %v1239 = vadd.f32 %v1238, %v1106
    %v1240 = vadd.f32 %v1239, %v1107
    %v1241 = vadd.f32 %v1240, %v1108
    %v1242 = vadd.f32 %v1241, %v1109
    %v1243 = vadd.f32 %v1242, %v1110
    %v1244 = vadd.f32 %v1243, %v1111
    %v1245 = vadd.f32 %v1244, %v1112
    %v1246 = vadd.f32 %v1245, %v1113
    %v1247 = vadd.f32 %v1246, %v1114
    %v1248 = vrot.slane %v1247, 4
    %v1249 = vadd.f32 %v1247, %v1248
    %v1250 = vrot.slane %v1249, 2
    %v1251 = vadd.f32 %v1249, %v1250
    %v1252 = vrot.slane %v1251, 1
    %v1253 = vadd.f32 %v1251, %v1252
    %v1254 = vadd.f32 %v1115, %v1116
    %v1255 = vadd.f32 %v1254, %v1117
    %v1256 = vadd.f32 %v1255, %v1118
    %v1257 = vadd.f32 %v1256, %v1119
    %v1258 = vadd.f32 %v1257, %v1120
    %v1259 = vadd.f32 %v1258, %v1121
    %v1260 = vadd.f32 %v1259, %v1122
    %v1261 = vadd.f32 %v1260, %v1123
    %v1262 = vadd.f32 %v1261, %v1124
    %v1263 = vadd.f32 %v1262, %v1125
    %v1264 = vadd.f32 %v1263, %v1126
    %v1265 = vadd.f32 %v1264, %v1127
    %v1266 = vadd.f32 %v1265, %v1128
    %v1267 = vadd.f32 %v1266, %v1129
    %v1268 = vadd.f32 %v1267, %v1130
    %v1269 = vrot.slane %v1268, 4
    %v1270 = vadd.f32 %v1268, %v1269
    %v1271 = vrot.slane %v1270, 2
    %v1272 = vadd.f32 %v1270, %v1271
    %v1273 = vrot.slane %v1272, 1
    %v1274 = vadd.f32 %v1272, %v1273
    %v1275 = vadd.f32 %v1131, %v1132
    %v1276 = vadd.f32 %v1275, %v1133
    %v1277 = vadd.f32 %v1276, %v1134
    %v1278 = vadd.f32 %v1277, %v1135
    %v1279 = vadd.f32 %v1278, %v1136
    %v1280 = vadd.f32 %v1279, %v1137
    %v1281 = vadd.f32 %v1280, %v1138
    %v1282 = vadd.f32 %v1281, %v1139
    %v1283 = vadd.f32 %v1282, %v1140
    %v1284 = vadd.f32 %v1283, %v1141
    %v1285 = vadd.f32 %v1284, %v1142
    %v1286 = vadd.f32 %v1285, %v1143
    %v1287 = vadd.f32 %v1286, %v1144
    %v1288 = vadd.f32 %v1287, %v1145
    %v1289 = vadd.f32 %v1288, %v1146
    %v1290 = vrot.slane %v1289, 4
    %v1291 = vadd.f32 %v1289, %v1290
    %v1292 = vrot.slane %v1291, 2
    %v1293 = vadd.f32 %v1291, %v1292
    %v1294 = vrot.slane %v1293, 1
    %v1295 = vadd.f32 %v1293, %v1294
    %v1296 = vadd.f32 %v1147, %v1148
    %v1297 = vadd.f32 %v1296, %v1149
    %v1298 = vadd.f32 %v1297, %v1150
    %v1299 = vadd.f32 %v1298, %v1151
    %v1300 = vadd.f32 %v1299, %v1152
    %v1301 = vadd.f32 %v1300, %v1153
    %v1302 = vadd.f32 %v1301, %v1154
    %v1303 = vadd.f32 %v1302, %v1155
    %v1304 = vadd.f32 %v1303, %v1156
    %v1305 = vadd.f32 %v1304, %v1157
    %v1306 = vadd.f32 %v1305, %v1158
    %v1307 = vadd.f32 %v1306, %v1159
    %v1308 = vadd.f32 %v1307, %v1160
    %v1309 = vadd.f32 %v1308, %v1161
    %v1310 = vadd.f32 %v1309, %v1162
    %v1311 = vrot.slane %v1310, 4
    %v1312 = vadd.f32 %v1310, %v1311
    %v1313 = vrot.slane %v1312, 2
    %v1314 = vadd.f32 %v1312, %v1313
    %v1315 = vrot.slane %v1314, 1
    %v1316 = vadd.f32 %v1314, %v1315
    %v1317 = vadd.f32 %v1163, %v1164
    %v1318 = vadd.f32 %v1317, %v1165
    %v1319 = vadd.f32 %v1318, %v1166
    %v1320 = vadd.f32 %v1319, %v1167
    %v1321 = vadd.f32 %v1320, %v1168
    %v1322 = vadd.f32 %v1321, %v1169
    %v1323 = vadd.f32 %v1322, %v1170
    %v1324 = vadd.f32 %v1323, %v1171
    %v1325 = vadd.f32 %v1324, %v1172
    %v1326 = vadd.f32 %v1325, %v1173
    %v1327 = vadd.f32 %v1326, %v1174
    %v1328 = vadd.f32 %v1327, %v1175
    %v1329 = vadd.f32 %v1328, %v1176
    %v1330 = vadd.f32 %v1329, %v1177
    %v1331 = vadd.f32 %v1330, %v1178
    %v1332 = vrot.slane %v1331, 4
    %v1333 = vadd.f32 %v1331, %v1332
    %v1334 = vrot.slane %v1333, 2
    %v1335 = vadd.f32 %v1333, %v1334
    %v1336 = vrot.slane %v1335, 1
    %v1337 = vadd.f32 %v1335, %v1336
    %v1338 = vadd.f32 %v1179, %v1180
    %v1339 = vadd.f32 %v1338, %v1181
    %v1340 = vadd.f32 %v1339, %v1182
    %v1341 = vadd.f32 %v1340, %v1183
    %v1342 = vadd.f32 %v1341, %v1184
    %v1343 = vadd.f32 %v1342, %v1185
    %v1344 = vadd.f32 %v1343, %v1186
    %v1345 = vadd.f32 %v1344, %v1187
    %v1346 = vadd.f32 %v1345, %v1188
    %v1347 = vadd.f32 %v1346, %v1189
    %v1348 = vadd.f32 %v1347, %v1190
    %v1349 = vadd.f32 %v1348, %v1191
    %v1350 = vadd.f32 %v1349, %v1192
    %v1351 = vadd.f32 %v1350, %v1193
    %v1352 = vadd.f32 %v1351, %v1194
    %v1353 = vrot.slane %v1352, 4
    %v1354 = vadd.f32 %v1352, %v1353
    %v1355 = vrot.slane %v1354, 2
    %v1356 = vadd.f32 %v1354, %v1355
    %v1357 = vrot.slane %v1356, 1
    %v1358 = vadd.f32 %v1356, %v1357
    %v1359 = vadd.f32 %v1195, %v1196
    %v1360 = vadd.f32 %v1359, %v1197
    %v1361 = vadd.f32 %v1360, %v1198
    %v1362 = vadd.f32 %v1361, %v1199
    %v1363 = vadd.f32 %v1362, %v1200
    %v1364 = vadd.f32 %v1363, %v1201
    %v1365 = vadd.f32 %v1364, %v1202
    %v1366 = vadd.f32 %v1365, %v1203
    %v1367 = vadd.f32 %v1366, %v1204
    %v1368 = vadd.f32 %v1367, %v1205
    %v1369 = vadd.f32 %v1368, %v1206
    %v1370 = vadd.f32 %v1369, %v1207
    %v1371 = vadd.f32 %v1370, %v1208
    %v1372 = vadd.f32 %v1371, %v1209
    %v1373 = vadd.f32 %v1372, %v1210
    %v1374 = vrot.slane %v1373, 4
    %v1375 = vadd.f32 %v1373, %v1374
    %v1376 = vrot.slane %v1375, 2
    %v1377 = vadd.f32 %v1375, %v1376
    %v1378 = vrot.slane %v1377, 1
    %v1379 = vadd.f32 %v1377, %v1378
    %vm1388 = vcmask 1041409
    %v1389 = vsel %vm1388, %v1253, %v1232
    %vm1390 = vcmask 1042434
    %v1391 = vsel %vm1390, %v1274, %v1389
    %vm1392 = vcmask 1043459
    %v1393 = vsel %vm1392, %v1295, %v1391
    %vm1394 = vcmask 1044484
    %v1395 = vsel %vm1394, %v1316, %v1393
    %vm1396 = vcmask 1045509
    %v1397 = vsel %vm1396, %v1337, %v1395
    %vm1398 = vcmask 1046534
    %v1399 = vsel %vm1398, %v1358, %v1397
    %vm1400 = vcmask 1047559
    %v1401 = vsel %vm1400, %v1379, %v1399
    %v1403 = vadd.f32 %v1211, %v1401
    %1404 = vst [vmem:[#allocation2] sm:$0xff] %v1403
    %v1405 = vld [vmem:[#allocation2] sm:$0xff]
    %1406 = vst [vmem:[#allocation8] sm:$0xff] %v1405
    // Predicated region
    $region22: #{tpu_custom_call.1} parent=1 // pred_check
      _
    $region23: #{tpu_custom_call.1} parent=1 // pred_check_branch
      %1408 = sbr.rel (0) target = $region25
    $region24: #{tpu_custom_call.1} parent=1 // pred_region
      %1410 = vsyncadd [#allocation5], 0
      %s1412 = sshll.u32 [#allocation8], 4
      %s1413 = int_to_ptr.vmem [resolvable:$true] %s1412
      %s1414 = sshll.u32 %s2, 4
      %s1415 = int_to_ptr.hbm [resolvable:$true] %s1414
      %1417 = dma.vmem_to_hbm [thread:$0]  %s1413, 128, %s1415, [#allocation5]
    $region25: #{tpu_custom_call.1} parent=1 // pred_fallthru
      _
    // Predicated region
    $region26: #{tpu_custom_call.1} parent=1 // pred_check
      _
    $region27: #{tpu_custom_call.1} parent=1 // pred_check_branch
      %1419 = sbr.rel (0) target = $region29
    $region28: #{tpu_custom_call.1} parent=1 // pred_region
      %1421 = dma.done [#allocation5], 128
    $region29: #{tpu_custom_call.1} parent=1 // pred_fallthru
      _
    %1422 = vsyncpa [#allocation4], 1
    %1423 = vsyncpa [#allocation7], 1
    %1424 = vsyncpa [#allocation5], 1

</llo_original>
